<compile_context>
chip_gen: v7x
topology: tpu7x:2x2x1
jax: 0.10.0
libtpu: 0.0.40
codegen_flags: <defaults>
</compile_context>

<pallas_src>
import jax
import jax.numpy as jnp
from jax.experimental import pallas as pl
from jax.experimental.pallas import tpu as pltpu


def _potential_kernel(state_ref, action_ref, w1s_ref, w1a_ref, b1_ref,
                      w2_ref, b2_ref, w3_ref, b3_ref, out_ref):
    """Whole 3-layer MLP for one batch tile; all operands resident in VMEM
    (b3 in SMEM).  Writes one lane-dense (1, tb) output row."""
    # Layer 1: x @ W1 + b1 == state @ W1[:S] + action @ W1[S:] + b1   (MXU)
    h1 = jnp.dot(state_ref[...], w1s_ref[...],
                 preferred_element_type=jnp.float32)
    h1 = h1 + jnp.dot(action_ref[...], w1a_ref[...],
                      preferred_element_type=jnp.float32)
    h1 = jnp.maximum(h1 + b1_ref[...], 0.0)

    # Layer 2: Linear + ReLU                                          (MXU)
    h2 = jnp.dot(h1, w2_ref[...], preferred_element_type=jnp.float32)
    h2 = jnp.maximum(h2 + b2_ref[...], 0.0)

    # Layer 3 (out width 1): VPU multiply + XLU lane reduction instead of an
    # MXU matmul with N=1.  b3 is a scalar read from SMEM.
    fc = jnp.sum(h2 * w3_ref[...], axis=-1) + b3_ref[0]               # (tb,)
    out_ref[...] = (-jnp.abs(fc))[None, :].astype(out_ref.dtype)      # (1, tb)


def _round_up(x, m):
    return ((x + m - 1) // m) * m


def potential_forward(state, action, params, *, batch_tile=512):
    """JAX wrapper: split-W1 (no concat) + Pallas MLP kernel.

    state: (B, S), action: (B, A); params as produced by init_params.
    Returns (B, 1) array of -abs(MLP(cat(state, action))).
    """
    w1, b1, w2, b2, w3, b3 = params
    B, S = state.shape
    A = action.shape[-1]
    H = w1.shape[1]

    # Split W1 so the (B, S+A) concat never materializes in HBM.
    w1_s = w1[:S]
    w1_a = w1[S:]

    # Biases as (1, H) rows (broadcast against (tb, H)); w3 as a (1, H) row
    # for the VPU epilogue; b3 as a 1-element SMEM scalar.
    b1_2d = b1.reshape(1, H)
    b2_2d = b2.reshape(1, H)
    w3_row = w3.reshape(1, H)
    b3_1d = b3.reshape(1)

    # Batch tile: multiple of 128 (MXU M fill + lane-dense output row).
    # Pad the batch up to a tile multiple instead of asserting divisibility.
    tb = _round_up(min(batch_tile, _round_up(B, 128)), 128)
    Bp = _round_up(B, tb)
    if Bp != B:
        pad = Bp - B
        state = jnp.pad(state, ((0, pad), (0, 0)))
        action = jnp.pad(action, ((0, pad), (0, 0)))
    n_tiles = Bp // tb

    # Weights are grid-invariant (constant block index) and tiny at these
    # sizes; Pallas does not re-DMA a block whose index is unchanged.
    const = lambda shape: pl.BlockSpec(shape, lambda i: (0, 0))

    out = pl.pallas_call(
        _potential_kernel,
        # Lane-dense output: each grid step writes a (1, tb) row; the wrapper
        # reshapes (n_tiles, tb) -> (B, 1) afterwards.
        out_shape=jax.ShapeDtypeStruct((n_tiles, tb), state.dtype),
        grid_spec=pltpu.PrefetchScalarGridSpec(
            num_scalar_prefetch=0,
            grid=(n_tiles,),
            in_specs=[
                pl.BlockSpec((tb, S), lambda i: (i, 0)),      # state tile
                pl.BlockSpec((tb, A), lambda i: (i, 0)),      # action tile
                const(w1_s.shape),                            # W1[:S]  (S, H)
                const(w1_a.shape),                            # W1[S:]  (A, H)
                const(b1_2d.shape),                           # b1      (1, H)
                const(w2.shape),                              # W2      (H, H)
                const(b2_2d.shape),                           # b2      (1, H)
                const(w3_row.shape),                          # w3 row  (1, H)
                pl.BlockSpec(memory_space=pltpu.MemorySpace.SMEM),  # b3 scalar
            ],
            out_specs=pl.BlockSpec((1, tb), lambda i: (i, 0)),
        ),
        compiler_params=pltpu.CompilerParams(
            dimension_semantics=("parallel",)),
    )(state, action, w1_s, w1_a, b1_2d, w2, b2_2d, w3_row, b3_1d)

    # (n_tiles, tb) row-major == batch order; drop the padding rows.
    return out.reshape(Bp, 1)[:B]


def init_params(key, state_dim, action_dim, hidden_dim, dtype=jnp.float32):
    """Deterministic synthetic parameters (shapes match nn.Linear layers,
    stored as (in, out) i.e. already transposed)."""
    d_in = state_dim + action_dim
    k1, k2, k3, k4, k5, k6 = jax.random.split(key, 6)
    scale1 = 1.0 / jnp.sqrt(d_in)
    scale2 = 1.0 / jnp.sqrt(hidden_dim)
    w1 = jax.random.uniform(k1, (d_in, hidden_dim), dtype, -scale1, scale1)
    b1 = jax.random.uniform(k2, (hidden_dim,), dtype, -scale1, scale1)
    w2 = jax.random.uniform(k3, (hidden_dim, hidden_dim), dtype, -scale2, scale2)
    b2 = jax.random.uniform(k4, (hidden_dim,), dtype, -scale2, scale2)
    w3 = jax.random.uniform(k5, (hidden_dim, 1), dtype, -scale2, scale2)
    b3 = jax.random.uniform(k6, (1,), dtype, -scale2, scale2)
    return (w1, b1, w2, b2, w3, b3)


def potential_ref(state, action, params):
    """Pure-JAX reference for correctness check."""
    w1, b1, w2, b2, w3, b3 = params
    x = jnp.concatenate([state, action], axis=-1)
    h1 = jax.nn.relu(x @ w1 + b1)
    h2 = jax.nn.relu(h1 @ w2 + b2)
    fc = h2 @ w3 + b3
    return -jnp.abs(fc)


if __name__ == "__main__":
    batch, state_dim, action_dim, hidden_dim = 8, 4, 4, 32

    key = jax.random.PRNGKey(0)
    kp, ks, ka = jax.random.split(key, 3)
    params = init_params(kp, state_dim, action_dim, hidden_dim)
    state = jax.random.normal(ks, (batch, state_dim), jnp.float32)
    action = jax.random.normal(ka, (batch, action_dim), jnp.float32)

    out = potential_forward(state, action, params)
    out = jax.block_until_ready(out)

    ref = potential_ref(state, action, params)
    assert out.shape == (batch, 1)
    assert jnp.allclose(out, ref, atol=1e-5, rtol=1e-5), "mismatch vs reference"

    print("KERNEL_OK")
</pallas_src>

<mosaic_0001>
module attributes {stable_mosaic.version = 11 : i64} {
  func.func @_potential_kernel(%arg0: i32, %arg1: memref<128x4xf32, #tpu.memory_space<vmem>>, %arg2: memref<128x4xf32, #tpu.memory_space<vmem>>, %arg3: memref<4x32xf32, #tpu.memory_space<vmem>>, %arg4: memref<4x32xf32, #tpu.memory_space<vmem>>, %arg5: memref<1x32xf32, #tpu.memory_space<vmem>>, %arg6: memref<32x32xf32, #tpu.memory_space<vmem>>, %arg7: memref<1x32xf32, #tpu.memory_space<vmem>>, %arg8: memref<1x32xf32, #tpu.memory_space<vmem>>, %arg9: memref<1xf32, #tpu.memory_space<smem>>, %arg10: memref<1x128xf32, #tpu.memory_space<vmem>>) attributes {dimension_semantics = [#tpu.dimension_semantics<parallel>], iteration_bounds = array<i64: 1>, scalar_prefetch = 0 : i64, scratch_operands = 0 : i64, tpu.core_type = #tpu.core_type<tc>, window_params = [{transform_indices = @transform_0, window_bounds = array<i64: 128, 4>}, {transform_indices = @transform_1, window_bounds = array<i64: 128, 4>}, {pipeline_mode = #tpu.pipeline_mode<synchronous>, transform_indices = @transform_2, window_bounds = array<i64: 4, 32>}, {pipeline_mode = #tpu.pipeline_mode<synchronous>, transform_indices = @transform_3, window_bounds = array<i64: 4, 32>}, {pipeline_mode = #tpu.pipeline_mode<synchronous>, transform_indices = @transform_4, window_bounds = array<i64: 1, 32>}, {pipeline_mode = #tpu.pipeline_mode<synchronous>, transform_indices = @transform_5, window_bounds = array<i64: 32, 32>}, {pipeline_mode = #tpu.pipeline_mode<synchronous>, transform_indices = @transform_6, window_bounds = array<i64: 1, 32>}, {pipeline_mode = #tpu.pipeline_mode<synchronous>, transform_indices = @transform_7, window_bounds = array<i64: 1, 32>}, {transform_indices = @transform_8, window_bounds = array<i64: 1>}, {transform_indices = @transform_9, window_bounds = array<i64: 1, 128>}]} {
    %c0 = arith.constant 0 : index
    %c0_0 = arith.constant 0 : index
    %0 = vector.load %arg1[%c0, %c0_0] : memref<128x4xf32, #tpu.memory_space<vmem>>, vector<128x4xf32>
    %c0_1 = arith.constant 0 : index
    %c0_2 = arith.constant 0 : index
    %1 = vector.load %arg3[%c0_1, %c0_2] : memref<4x32xf32, #tpu.memory_space<vmem>>, vector<4x32xf32>
    %cst = arith.constant dense<0.000000e+00> : vector<128x32xf32>
    %2 = tpu.matmul %0, %1, %cst {dimension_numbers = #tpu.dot_dimension_numbers<[1], [0], [0], [1], [0, 0, 1, 1], [], []>} : vector<128x4xf32>, vector<4x32xf32>, vector<128x32xf32> -> vector<128x32xf32>
    %c0_3 = arith.constant 0 : index
    %c0_4 = arith.constant 0 : index
    %3 = vector.load %arg2[%c0_3, %c0_4] : memref<128x4xf32, #tpu.memory_space<vmem>>, vector<128x4xf32>
    %c0_5 = arith.constant 0 : index
    %c0_6 = arith.constant 0 : index
    %4 = vector.load %arg4[%c0_5, %c0_6] : memref<4x32xf32, #tpu.memory_space<vmem>>, vector<4x32xf32>
    %cst_7 = arith.constant dense<0.000000e+00> : vector<128x32xf32>
    %5 = tpu.matmul %3, %4, %cst_7 {dimension_numbers = #tpu.dot_dimension_numbers<[1], [0], [0], [1], [0, 0, 1, 1], [], []>} : vector<128x4xf32>, vector<4x32xf32>, vector<128x32xf32> -> vector<128x32xf32>
    %6 = arith.addf %2, %5 : vector<128x32xf32>
    %c0_8 = arith.constant 0 : index
    %c0_9 = arith.constant 0 : index
    %7 = vector.load %arg5[%c0_8, %c0_9] : memref<1x32xf32, #tpu.memory_space<vmem>>, vector<1x32xf32>
    %8 = vector.broadcast %7 : vector<1x32xf32> to vector<128x32xf32>
    %9 = arith.addf %6, %8 : vector<128x32xf32>
    %cst_10 = arith.constant 0.000000e+00 : f32
    %10 = vector.broadcast %cst_10 : f32 to vector<128x32xf32>
    %11 = arith.maximumf %9, %10 : vector<128x32xf32>
    %c0_11 = arith.constant 0 : index
    %c0_12 = arith.constant 0 : index
    %12 = vector.load %arg6[%c0_11, %c0_12] : memref<32x32xf32, #tpu.memory_space<vmem>>, vector<32x32xf32>
    %cst_13 = arith.constant dense<0.000000e+00> : vector<128x32xf32>
    %13 = tpu.matmul %11, %12, %cst_13 {dimension_numbers = #tpu.dot_dimension_numbers<[1], [0], [0], [1], [0, 0, 1, 1], [], []>} : vector<128x32xf32>, vector<32x32xf32>, vector<128x32xf32> -> vector<128x32xf32>
    %c0_14 = arith.constant 0 : index
    %c0_15 = arith.constant 0 : index
    %14 = vector.load %arg7[%c0_14, %c0_15] : memref<1x32xf32, #tpu.memory_space<vmem>>, vector<1x32xf32>
    %15 = vector.broadcast %14 : vector<1x32xf32> to vector<128x32xf32>
    %16 = arith.addf %13, %15 : vector<128x32xf32>
    %cst_16 = arith.constant 0.000000e+00 : f32
    %17 = vector.broadcast %cst_16 : f32 to vector<128x32xf32>
    %18 = arith.maximumf %16, %17 : vector<128x32xf32>
    %c0_17 = arith.constant 0 : index
    %c0_18 = arith.constant 0 : index
    %19 = vector.load %arg8[%c0_17, %c0_18] : memref<1x32xf32, #tpu.memory_space<vmem>>, vector<1x32xf32>
    %20 = vector.broadcast %19 : vector<1x32xf32> to vector<128x32xf32>
    %21 = arith.mulf %18, %20 : vector<128x32xf32>
    %cst_19 = arith.constant dense<0.000000e+00> : vector<128xf32>
    %22 = vector.multi_reduction <add>, %21, %cst_19 [1] : vector<128x32xf32> to vector<128xf32>
    %c0_20 = arith.constant 0 : index
    %23 = memref.load %arg9[%c0_20] : memref<1xf32, #tpu.memory_space<smem>>
    %24 = vector.broadcast %23 : f32 to vector<128xf32>
    %25 = arith.addf %22, %24 : vector<128xf32>
    %26 = math.absf %25 : vector<128xf32>
    %cst_21 = arith.constant 0.000000e+00 : f32
    %27 = vector.broadcast %cst_21 : f32 to vector<128xf32>
    %28 = arith.subf %27, %26 : vector<128xf32>
    %29 = vector.shape_cast %28 : vector<128xf32> to vector<1x128xf32>
    %c0_22 = arith.constant 0 : index
    %c0_23 = arith.constant 0 : index
    %30 = vector.load %arg10[%c0_22, %c0_23] : memref<1x128xf32, #tpu.memory_space<vmem>>, vector<1x128xf32>
    tpu.vector_store %arg10[%c0_22, %c0_23], %29 {strides = array<i32>} : memref<1x128xf32, #tpu.memory_space<vmem>>, vector<1x128xf32>,
    return
  }
  func.func @transform_0(%arg0: i32) -> (i32, i32) {
    %c0_i32 = arith.constant 0 : i32
    %c0_i32_0 = arith.constant 0 : i32
    return %arg0, %c0_i32 : i32, i32
  }
  func.func @transform_1(%arg0: i32) -> (i32, i32) {
    %c0_i32 = arith.constant 0 : i32
    %c0_i32_0 = arith.constant 0 : i32
    return %arg0, %c0_i32 : i32, i32
  }
  func.func @transform_2(%arg0: i32) -> (i32, i32) {
    %c0_i32 = arith.constant 0 : i32
    %c0_i32_0 = arith.constant 0 : i32
    %c0_i32_1 = arith.constant 0 : i32
    return %c0_i32, %c0_i32_0 : i32, i32
  }
  func.func @transform_3(%arg0: i32) -> (i32, i32) {
    %c0_i32 = arith.constant 0 : i32
    %c0_i32_0 = arith.constant 0 : i32
    %c0_i32_1 = arith.constant 0 : i32
    return %c0_i32, %c0_i32_0 : i32, i32
  }
  func.func @transform_4(%arg0: i32) -> (i32, i32) {
    %c0_i32 = arith.constant 0 : i32
    %c0_i32_0 = arith.constant 0 : i32
    %c0_i32_1 = arith.constant 0 : i32
    return %c0_i32, %c0_i32_0 : i32, i32
  }
  func.func @transform_5(%arg0: i32) -> (i32, i32) {
    %c0_i32 = arith.constant 0 : i32
    %c0_i32_0 = arith.constant 0 : i32
    %c0_i32_1 = arith.constant 0 : i32
    return %c0_i32, %c0_i32_0 : i32, i32
  }
  func.func @transform_6(%arg0: i32) -> (i32, i32) {
    %c0_i32 = arith.constant 0 : i32
    %c0_i32_0 = arith.constant 0 : i32
    %c0_i32_1 = arith.constant 0 : i32
    return %c0_i32, %c0_i32_0 : i32, i32
  }
  func.func @transform_7(%arg0: i32) -> (i32, i32) {
    %c0_i32 = arith.constant 0 : i32
    %c0_i32_0 = arith.constant 0 : i32
    %c0_i32_1 = arith.constant 0 : i32
    return %c0_i32, %c0_i32_0 : i32, i32
  }
  func.func @transform_8(%arg0: i32) -> i32 {
    %c0_i32 = arith.constant 0 : i32
    %c0_i32_0 = arith.constant 0 : i32
    return %c0_i32 : i32
  }
  func.func @transform_9(%arg0: i32) -> (i32, i32) {
    %c0_i32 = arith.constant 0 : i32
    %c0_i32_0 = arith.constant 0 : i32
    return %arg0, %c0_i32 : i32, i32
  }
}

</mosaic_0001>

<llo_original>
// kernel: tpu_custom_call.1
$region0: #{tpu_custom_call.1}
  #allocation0 [shape = 'u32[]', space=smem, size = 0x4, offset = 0x4, fixed_abs, tag = 'smem constant byte address 0x4 - core index']
  #allocation1 [shape = 'u32[144,128]{1,0:T(1,128)}', space=vmem, size = 0x12000, scoped, tag = 'internal scratch']
  #allocation2 [shape = 'f32[1]{0:T(128)S(6)}', space=smem, size = 0x200, scoped, tag = 'scoped memory for tpu_custom_call.1']
  %s0 = inlined_call_operand.vmem [shape: f32[128,4], index: 0, kind: input, shape index: {}]
  %s1 = inlined_call_operand.vmem [shape: f32[128,4], index: 1, kind: input, shape index: {}]
  %s2 = inlined_call_operand.vmem [shape: f32[4,32], index: 2, kind: input, shape index: {}]
  %s3 = inlined_call_operand.vmem [shape: f32[4,32], index: 3, kind: input, shape index: {}]
  %s4 = inlined_call_operand.vmem [shape: f32[1,32], index: 4, kind: input, shape index: {}]
  %s5 = inlined_call_operand.vmem [shape: f32[32,32], index: 5, kind: input, shape index: {}]
  %s6 = inlined_call_operand.vmem [shape: f32[1,32], index: 6, kind: input, shape index: {}]
  %s7 = inlined_call_operand.vmem [shape: f32[1,32], index: 7, kind: input, shape index: {}]
  %s8 = inlined_call_operand.<no memory space> [shape: f32[1], index: 8, kind: input, shape index: {}]
  %s9 = inlined_call_operand.hbm [shape: f32[1,128], index: 9, kind: output, shape index: {}]
  %s10 = sld [smem:[#allocation0]]
  $region46: #{tpu_custom_call.1} parent=0
    _
  %s12 = ssub.s32 1, %s10
  %s13 = scalar_select 0, %s12, %s10
  %14 = sst [smem:[#allocation2]] %s8
  $region1: #{tpu_custom_call.1} parent=0
    #allocation3 [shape = 'u8[512]{0}', space=vmem, size = 0x400, scoped, tag = 'output window, operand 0, single buffered']
    #allocation4 [shape = 's32[1]{0}', space=sflag, size = 0x4, scoped, tag = 'scoped memory for tpu_custom_call.1']
    %15 = vsyncpa [#allocation4], 0
    // Predicated region
    $region2: #{tpu_custom_call.1} parent=1 // pred_check
      _
    $region3: #{tpu_custom_call.1} parent=1 // pred_check_branch
      %17 = sbr.rel (0) target = $region5
    $region4: #{tpu_custom_call.1} parent=1 // pred_region
      _
    $region5: #{tpu_custom_call.1} parent=1 // pred_fallthru
      _
    // Predicated region
    $region6: #{tpu_custom_call.1} parent=1 // pred_check
      _
    $region7: #{tpu_custom_call.1} parent=1 // pred_check_branch
      %19 = sbr.rel (0) target = $region9
    $region8: #{tpu_custom_call.1} parent=1 // pred_region
      _
    $region9: #{tpu_custom_call.1} parent=1 // pred_fallthru
      _
    // Predicated region
    $region10: #{tpu_custom_call.1} parent=1 // pred_check
      _
    $region11: #{tpu_custom_call.1} parent=1 // pred_check_branch
      %21 = sbr.rel (0) target = $region13
    $region12: #{tpu_custom_call.1} parent=1 // pred_region
      _
    $region13: #{tpu_custom_call.1} parent=1 // pred_fallthru
      _
    // Predicated region
    $region14: #{tpu_custom_call.1} parent=1 // pred_check
      _
    $region15: #{tpu_custom_call.1} parent=1 // pred_check_branch
      %23 = sbr.rel (0) target = $region17
    $region16: #{tpu_custom_call.1} parent=1 // pred_region
      _
    $region17: #{tpu_custom_call.1} parent=1 // pred_fallthru
      _
    // Predicated region
    $region18: #{tpu_custom_call.1} parent=1 // pred_check
      _
    $region19: #{tpu_custom_call.1} parent=1 // pred_check_branch
      %25 = sbr.rel (0) target = $region21
    $region20: #{tpu_custom_call.1} parent=1 // pred_region
      _
    $region21: #{tpu_custom_call.1} parent=1 // pred_fallthru
      _
    // Predicated region
    $region22: #{tpu_custom_call.1} parent=1 // pred_check
      _
    $region23: #{tpu_custom_call.1} parent=1 // pred_check_branch
      %27 = sbr.rel (0) target = $region25
    $region24: #{tpu_custom_call.1} parent=1 // pred_region
      _
    $region25: #{tpu_custom_call.1} parent=1 // pred_fallthru
      _
    // Predicated region
    $region26: #{tpu_custom_call.1} parent=1 // pred_check
      _
    $region27: #{tpu_custom_call.1} parent=1 // pred_check_branch
      %29 = sbr.rel (0) target = $region29
    $region28: #{tpu_custom_call.1} parent=1 // pred_region
      _
    $region29: #{tpu_custom_call.1} parent=1 // pred_fallthru
      _
    // Predicated region
    $region30: #{tpu_custom_call.1} parent=1 // pred_check
      _
    $region31: #{tpu_custom_call.1} parent=1 // pred_check_branch
      %31 = sbr.rel (0) target = $region33
    $region32: #{tpu_custom_call.1} parent=1 // pred_region
      _
    $region33: #{tpu_custom_call.1} parent=1 // pred_fallthru
      _
    // Predicated region
    $region34: #{tpu_custom_call.1} parent=1 // pred_check
      _
    $region35: #{tpu_custom_call.1} parent=1 // pred_check_branch
      %33 = sbr.rel (0) target = $region37
    $region36: #{tpu_custom_call.1} parent=1 // pred_region
      _
    $region37: #{tpu_custom_call.1} parent=1 // pred_fallthru
      _
    %v34 = vld [vmem:[%s0] sm:$0xff]
    %v35 = vld [vmem:[%s0 + $0x8] sm:$0xff]
    %v36 = vld [vmem:[%s0 + $0x10] sm:$0xff]
    %v37 = vld [vmem:[%s0 + $0x18] sm:$0xff]
    %v38 = vld [vmem:[%s0 + $0x20] sm:$0xff]
    %v39 = vld [vmem:[%s0 + $0x28] sm:$0xff]
    %v40 = vld [vmem:[%s0 + $0x30] sm:$0xff]
    %v41 = vld [vmem:[%s0 + $0x38] sm:$0xff]
    %v42 = vld [vmem:[%s0 + $0x40] sm:$0xff]
    %v43 = vld [vmem:[%s0 + $0x48] sm:$0xff]
    %v44 = vld [vmem:[%s0 + $0x50] sm:$0xff]
    %v45 = vld [vmem:[%s0 + $0x58] sm:$0xff]
    %v46 = vld [vmem:[%s0 + $0x60] sm:$0xff]
    %v47 = vld [vmem:[%s0 + $0x68] sm:$0xff]
    %v48 = vld [vmem:[%s0 + $0x70] sm:$0xff]
    %v49 = vld [vmem:[%s0 + $0x78] sm:$0xff]
    %v50 = vld [vmem:[%s2] sm:$0xf]
    %v51 = vld [vmem:[%s1] sm:$0xff]
    %v52 = vld [vmem:[%s1 + $0x8] sm:$0xff]
    %v53 = vld [vmem:[%s1 + $0x10] sm:$0xff]
    %v54 = vld [vmem:[%s1 + $0x18] sm:$0xff]
    %v55 = vld [vmem:[%s1 + $0x20] sm:$0xff]
    %v56 = vld [vmem:[%s1 + $0x28] sm:$0xff]
    %v57 = vld [vmem:[%s1 + $0x30] sm:$0xff]
    %v58 = vld [vmem:[%s1 + $0x38] sm:$0xff]
    %v59 = vld [vmem:[%s1 + $0x40] sm:$0xff]
    %v60 = vld [vmem:[%s1 + $0x48] sm:$0xff]
    %v61 = vld [vmem:[%s1 + $0x50] sm:$0xff]
    %v62 = vld [vmem:[%s1 + $0x58] sm:$0xff]
    %v63 = vld [vmem:[%s1 + $0x60] sm:$0xff]
    %v64 = vld [vmem:[%s1 + $0x68] sm:$0xff]
    %v65 = vld [vmem:[%s1 + $0x70] sm:$0xff]
    %v66 = vld [vmem:[%s1 + $0x78] sm:$0xff]
    %v67 = vld [vmem:[%s3] sm:$0xf]
    %vm68 = vcmask 31744
    %v70 = vsel %vm68, %v51, 0
    %v73 = vsel %vm68, %v52, 0
    %v76 = vsel %vm68, %v53, 0
    %v79 = vsel %vm68, %v54, 0
    %v82 = vsel %vm68, %v55, 0
    %v85 = vsel %vm68, %v56, 0
    %v88 = vsel %vm68, %v57, 0
    %v91 = vsel %vm68, %v58, 0
    %v94 = vsel %vm68, %v59, 0
    %v97 = vsel %vm68, %v60, 0
    %v100 = vsel %vm68, %v61, 0
    %v103 = vsel %vm68, %v62, 0
    %v106 = vsel %vm68, %v63, 0
    %v109 = vsel %vm68, %v64, 0
    %v112 = vsel %vm68, %v65, 0
    %v115 = vsel %vm68, %v66, 0
    %vm117 = vcmask 1043456
    %v119 = vsel %vm117, %v67, 0
    %121 = vmatprep.subr.mxu0 0.0
    %122 = vmatpush1.msra.mxu0 %v119
    %123 = vmatprep.subr.mxu0 0.0
    %124 = vmatpush1.msra.mxu0 0.0
    %125 = vmatprep.subr.mxu0 0.0
    %126 = vmatpush1.msra.mxu0 0.0
    %127 = vmatprep.subr.mxu0 0.0
    %128 = vmatpush1.msra.mxu0 0.0
    %129 = vmatprep.subr.mxu0 0.0
    %130 = vmatpush1.msra.mxu0 0.0
    %131 = vmatprep.subr.mxu0 0.0
    %132 = vmatpush1.msra.mxu0 0.0
    %133 = vmatprep.subr.mxu0 0.0
    %134 = vmatpush1.msra.mxu0 0.0
    %135 = vmatprep.subr.mxu0 0.0
    %136 = vmatpush1.msra.mxu0 0.0
    %137 = vmatprep.subr.mxu0 0.0
    %138 = vmatpush1.msra.mxu0 0.0
    %139 = vmatprep.subr.mxu0 0.0
    %140 = vmatpush1.msra.mxu0 0.0
    %141 = vmatprep.subr.mxu0 0.0
    %142 = vmatpush1.msra.mxu0 0.0
    %143 = vmatprep.subr.mxu0 0.0
    %144 = vmatpush1.msra.mxu0 0.0
    %145 = vmatprep.subr.mxu0 0.0
    %146 = vmatpush1.msra.mxu0 0.0
    %147 = vmatprep.subr.mxu0 0.0
    %148 = vmatpush1.msra.mxu0 0.0
    %149 = vmatprep.subr.mxu0 0.0
    %150 = vmatpush1.msra.mxu0 0.0
    %151 = vmatprep.subr.mxu0 0.0
    %152 = vmatpush1.msra.mxu0 0.0
    %153 = vmatprep.subr.mxu0 0.0
    %154 = vmatpush1.msra.mxu0 0.0
    %155 = vmatprep.subr.mxu0 0.0
    %156 = vmatpush1.msra.mxu0 0.0
    %157 = vmatprep.subr.mxu0 0.0
    %158 = vmatpush1.msra.mxu0 0.0
    %159 = vmatprep.subr.mxu0 0.0
    %160 = vmatpush1.msra.mxu0 0.0
    %161 = vmatprep.subr.mxu0 0.0
    %162 = vmatpush1.msra.mxu0 0.0
    %163 = vmatprep.subr.mxu0 0.0
    %164 = vmatpush1.msra.mxu0 0.0
    %165 = vmatprep.subr.mxu0 0.0
    %166 = vmatpush1.msra.mxu0 0.0
    %167 = vmatprep.subr.mxu0 0.0
    %168 = vmatpush1.msra.mxu0 0.0
    %169 = vmatprep.subr.mxu0 0.0
    %170 = vmatpush1.msra.mxu0 0.0
    %171 = vmatprep.subr.mxu0 0.0
    %172 = vmatpush1.msra.mxu0 0.0
    %173 = vmatprep.subr.mxu0 0.0
    %174 = vmatpush1.msra.mxu0 0.0
    %175 = vmatprep.subr.mxu0 0.0
    %176 = vmatpush1.msra.mxu0 0.0
    %177 = vmatprep.subr.mxu0 0.0
    %178 = vmatpush1.msra.mxu0 0.0
    %179 = vmatprep.subr.mxu0 0.0
    %180 = vmatpush1.msra.mxu0 0.0
    %181 = vmatprep.subr.mxu0 0.0
    %182 = vmatpush1.msra.mxu0 0.0
    %183 = vmatprep.subr.mxu0 0.0
    %184 = vmatpush1.msra.mxu0 0.0
    %185 = vmatprep.mubr.f32.mxu0 0.0
    %186 = vmatmul.mubr.f32.gmra.mrb[0].mxu0 %v70
    %v187 = vpop.f32.mrb[0].mxu0
    %v188 = vadd.f32 0.0, %v187
    %v189 = vpop.f32.mrb[0].mxu0
    %190 = vmatprep.mubr.f32.mxu0 0.0
    %191 = vmatmul.mubr.f32.gmra.mrb[0].mxu0 %v73
    %v192 = vpop.f32.mrb[0].mxu0
    %v193 = vadd.f32 0.0, %v192
    %v194 = vpop.f32.mrb[0].mxu0
    %195 = vmatprep.mubr.f32.mxu0 0.0
    %196 = vmatmul.mubr.f32.gmra.mrb[0].mxu0 %v76
    %v197 = vpop.f32.mrb[0].mxu0
    %v198 = vadd.f32 0.0, %v197
    %v199 = vpop.f32.mrb[0].mxu0
    %200 = vmatprep.mubr.f32.mxu0 0.0
    %201 = vmatmul.mubr.f32.gmra.mrb[0].mxu0 %v79
    %v202 = vpop.f32.mrb[0].mxu0
    %v203 = vadd.f32 0.0, %v202
    %v204 = vpop.f32.mrb[0].mxu0
    %205 = vmatprep.mubr.f32.mxu0 0.0
    %206 = vmatmul.mubr.f32.gmra.mrb[0].mxu0 %v82
    %v207 = vpop.f32.mrb[0].mxu0
    %v208 = vadd.f32 0.0, %v207
    %v209 = vpop.f32.mrb[0].mxu0
    %210 = vmatprep.mubr.f32.mxu0 0.0
    %211 = vmatmul.mubr.f32.gmra.mrb[0].mxu0 %v85
    %v212 = vpop.f32.mrb[0].mxu0
    %v213 = vadd.f32 0.0, %v212
    %v214 = vpop.f32.mrb[0].mxu0
    %215 = vmatprep.mubr.f32.mxu0 0.0
    %216 = vmatmul.mubr.f32.gmra.mrb[0].mxu0 %v88
    %v217 = vpop.f32.mrb[0].mxu0
    %v218 = vadd.f32 0.0, %v217
    %v219 = vpop.f32.mrb[0].mxu0
    %220 = vmatprep.mubr.f32.mxu0 0.0
    %221 = vmatmul.mubr.f32.gmra.mrb[0].mxu0 %v91
    %v222 = vpop.f32.mrb[0].mxu0
    %v223 = vadd.f32 0.0, %v222
    %v224 = vpop.f32.mrb[0].mxu0
    %225 = vmatprep.mubr.f32.mxu0 0.0
    %226 = vmatmul.mubr.f32.gmra.mrb[0].mxu0 %v94
    %v227 = vpop.f32.mrb[0].mxu0
    %v228 = vadd.f32 0.0, %v227
    %v229 = vpop.f32.mrb[0].mxu0
    %230 = vmatprep.mubr.f32.mxu0 0.0
    %231 = vmatmul.mubr.f32.gmra.mrb[0].mxu0 %v97
    %v232 = vpop.f32.mrb[0].mxu0
    %v233 = vadd.f32 0.0, %v232
    %v234 = vpop.f32.mrb[0].mxu0
    %235 = vmatprep.mubr.f32.mxu0 0.0
    %236 = vmatmul.mubr.f32.gmra.mrb[0].mxu0 %v100
    %v237 = vpop.f32.mrb[0].mxu0
    %v238 = vadd.f32 0.0, %v237
    %v239 = vpop.f32.mrb[0].mxu0
    %240 = vmatprep.mubr.f32.mxu0 0.0
    %241 = vmatmul.mubr.f32.gmra.mrb[0].mxu0 %v103
    %v242 = vpop.f32.mrb[0].mxu0
    %v243 = vadd.f32 0.0, %v242
    %v244 = vpop.f32.mrb[0].mxu0
    %245 = vmatprep.mubr.f32.mxu0 0.0
    %246 = vmatmul.mubr.f32.gmra.mrb[0].mxu0 %v106
    %v247 = vpop.f32.mrb[0].mxu0
    %v248 = vadd.f32 0.0, %v247
    %v249 = vpop.f32.mrb[0].mxu0
    %250 = vmatprep.mubr.f32.mxu0 0.0
    %251 = vmatmul.mubr.f32.gmra.mrb[0].mxu0 %v109
    %v252 = vpop.f32.mrb[0].mxu0
    %v253 = vadd.f32 0.0, %v252
    %v254 = vpop.f32.mrb[0].mxu0
    %255 = vmatprep.mubr.f32.mxu0 0.0
    %256 = vmatmul.mubr.f32.gmra.mrb[0].mxu0 %v112
    %v257 = vpop.f32.mrb[0].mxu0
    %v258 = vadd.f32 0.0, %v257
    %v259 = vpop.f32.mrb[0].mxu0
    %260 = vmatprep.mubr.f32.mxu0 0.0
    %261 = vmatmul.mubr.f32.gmra.mrb[0].mxu0 %v115
    %v262 = vpop.f32.mrb[0].mxu0
    %v263 = vadd.f32 0.0, %v262
    %v264 = vpop.f32.mrb[0].mxu0
    %265 = vdwg.mxu0
    %v267 = vsel %vm68, %v34, 0
    %v270 = vsel %vm68, %v35, 0
    %v273 = vsel %vm68, %v36, 0
    %v276 = vsel %vm68, %v37, 0
    %v279 = vsel %vm68, %v38, 0
    %v282 = vsel %vm68, %v39, 0
    %v285 = vsel %vm68, %v40, 0
    %v288 = vsel %vm68, %v41, 0
    %v291 = vsel %vm68, %v42, 0
    %v294 = vsel %vm68, %v43, 0
    %v297 = vsel %vm68, %v44, 0
    %v300 = vsel %vm68, %v45, 0
    %v303 = vsel %vm68, %v46, 0
    %v306 = vsel %vm68, %v47, 0
    %v309 = vsel %vm68, %v48, 0
    %v312 = vsel %vm68, %v49, 0
    %v315 = vsel %vm117, %v50, 0
    %317 = vmatprep.subr.mxu0 0.0
    %318 = vmatpush1.msra.mxu0 %v315
    %319 = vmatprep.subr.mxu0 0.0
    %320 = vmatpush1.msra.mxu0 0.0
    %321 = vmatprep.subr.mxu0 0.0
    %322 = vmatpush1.msra.mxu0 0.0
    %323 = vmatprep.subr.mxu0 0.0
    %324 = vmatpush1.msra.mxu0 0.0
    %325 = vmatprep.subr.mxu0 0.0
    %326 = vmatpush1.msra.mxu0 0.0
    %327 = vmatprep.subr.mxu0 0.0
    %328 = vmatpush1.msra.mxu0 0.0
    %329 = vmatprep.subr.mxu0 0.0
    %330 = vmatpush1.msra.mxu0 0.0
    %331 = vmatprep.subr.mxu0 0.0
    %332 = vmatpush1.msra.mxu0 0.0
    %333 = vmatprep.subr.mxu0 0.0
    %334 = vmatpush1.msra.mxu0 0.0
    %335 = vmatprep.subr.mxu0 0.0
    %336 = vmatpush1.msra.mxu0 0.0
    %337 = vmatprep.subr.mxu0 0.0
    %338 = vmatpush1.msra.mxu0 0.0
    %339 = vmatprep.subr.mxu0 0.0
    %340 = vmatpush1.msra.mxu0 0.0
    %341 = vmatprep.subr.mxu0 0.0
    %342 = vmatpush1.msra.mxu0 0.0
    %343 = vmatprep.subr.mxu0 0.0
    %344 = vmatpush1.msra.mxu0 0.0
    %345 = vmatprep.subr.mxu0 0.0
    %346 = vmatpush1.msra.mxu0 0.0
    %347 = vmatprep.subr.mxu0 0.0
    %348 = vmatpush1.msra.mxu0 0.0
    %349 = vmatprep.subr.mxu0 0.0
    %350 = vmatpush1.msra.mxu0 0.0
    %351 = vmatprep.subr.mxu0 0.0
    %352 = vmatpush1.msra.mxu0 0.0
    %353 = vmatprep.subr.mxu0 0.0
    %354 = vmatpush1.msra.mxu0 0.0
    %355 = vmatprep.subr.mxu0 0.0
    %356 = vmatpush1.msra.mxu0 0.0
    %357 = vmatprep.subr.mxu0 0.0
    %358 = vmatpush1.msra.mxu0 0.0
    %359 = vmatprep.subr.mxu0 0.0
    %360 = vmatpush1.msra.mxu0 0.0
    %361 = vmatprep.subr.mxu0 0.0
    %362 = vmatpush1.msra.mxu0 0.0
    %363 = vmatprep.subr.mxu0 0.0
    %364 = vmatpush1.msra.mxu0 0.0
    %365 = vmatprep.subr.mxu0 0.0
    %366 = vmatpush1.msra.mxu0 0.0
    %367 = vmatprep.subr.mxu0 0.0
    %368 = vmatpush1.msra.mxu0 0.0
    %369 = vmatprep.subr.mxu0 0.0
    %370 = vmatpush1.msra.mxu0 0.0
    %371 = vmatprep.subr.mxu0 0.0
    %372 = vmatpush1.msra.mxu0 0.0
    %373 = vmatprep.subr.mxu0 0.0
    %374 = vmatpush1.msra.mxu0 0.0
    %375 = vmatprep.subr.mxu0 0.0
    %376 = vmatpush1.msra.mxu0 0.0
    %377 = vmatprep.subr.mxu0 0.0
    %378 = vmatpush1.msra.mxu0 0.0
    %379 = vmatprep.subr.mxu0 0.0
    %380 = vmatpush1.msra.mxu0 0.0
    %381 = vmatprep.mubr.f32.mxu0 0.0
    %382 = vmatmul.mubr.f32.gmra.mrb[0].mxu0 %v267
    %v383 = vpop.f32.mrb[0].mxu0
    %v384 = vadd.f32 %v188, %v383
    %v385 = vpop.f32.mrb[0].mxu0
    %386 = vmatprep.mubr.f32.mxu0 0.0
    %387 = vmatmul.mubr.f32.gmra.mrb[0].mxu0 %v270
    %v388 = vpop.f32.mrb[0].mxu0
    %v389 = vadd.f32 %v193, %v388
    %v390 = vpop.f32.mrb[0].mxu0
    %391 = vmatprep.mubr.f32.mxu0 0.0
    %392 = vmatmul.mubr.f32.gmra.mrb[0].mxu0 %v273
    %v393 = vpop.f32.mrb[0].mxu0
    %v394 = vadd.f32 %v198, %v393
    %v395 = vpop.f32.mrb[0].mxu0
    %396 = vmatprep.mubr.f32.mxu0 0.0
    %397 = vmatmul.mubr.f32.gmra.mrb[0].mxu0 %v276
    %v398 = vpop.f32.mrb[0].mxu0
    %v399 = vadd.f32 %v203, %v398
    %v400 = vpop.f32.mrb[0].mxu0
    %401 = vmatprep.mubr.f32.mxu0 0.0
    %402 = vmatmul.mubr.f32.gmra.mrb[0].mxu0 %v279
    %v403 = vpop.f32.mrb[0].mxu0
    %v404 = vadd.f32 %v208, %v403
    %v405 = vpop.f32.mrb[0].mxu0
    %406 = vmatprep.mubr.f32.mxu0 0.0
    %407 = vmatmul.mubr.f32.gmra.mrb[0].mxu0 %v282
    %v408 = vpop.f32.mrb[0].mxu0
    %v409 = vadd.f32 %v213, %v408
    %v410 = vpop.f32.mrb[0].mxu0
    %411 = vmatprep.mubr.f32.mxu0 0.0
    %412 = vmatmul.mubr.f32.gmra.mrb[0].mxu0 %v285
    %v413 = vpop.f32.mrb[0].mxu0
    %v414 = vadd.f32 %v218, %v413
    %v415 = vpop.f32.mrb[0].mxu0
    %416 = vmatprep.mubr.f32.mxu0 0.0
    %417 = vmatmul.mubr.f32.gmra.mrb[0].mxu0 %v288
    %v418 = vpop.f32.mrb[0].mxu0
    %v419 = vadd.f32 %v223, %v418
    %v420 = vpop.f32.mrb[0].mxu0
    %421 = vmatprep.mubr.f32.mxu0 0.0
    %422 = vmatmul.mubr.f32.gmra.mrb[0].mxu0 %v291
    %v423 = vpop.f32.mrb[0].mxu0
    %v424 = vadd.f32 %v228, %v423
    %v425 = vpop.f32.mrb[0].mxu0
    %426 = vmatprep.mubr.f32.mxu0 0.0
    %427 = vmatmul.mubr.f32.gmra.mrb[0].mxu0 %v294
    %v428 = vpop.f32.mrb[0].mxu0
    %v429 = vadd.f32 %v233, %v428
    %v430 = vpop.f32.mrb[0].mxu0
    %431 = vmatprep.mubr.f32.mxu0 0.0
    %432 = vmatmul.mubr.f32.gmra.mrb[0].mxu0 %v297
    %v433 = vpop.f32.mrb[0].mxu0
    %v434 = vadd.f32 %v238, %v433
    %v435 = vpop.f32.mrb[0].mxu0
    %436 = vmatprep.mubr.f32.mxu0 0.0
    %437 = vmatmul.mubr.f32.gmra.mrb[0].mxu0 %v300
    %v438 = vpop.f32.mrb[0].mxu0
    %v439 = vadd.f32 %v243, %v438
    %v440 = vpop.f32.mrb[0].mxu0
    %441 = vmatprep.mubr.f32.mxu0 0.0
    %442 = vmatmul.mubr.f32.gmra.mrb[0].mxu0 %v303
    %v443 = vpop.f32.mrb[0].mxu0
    %v444 = vadd.f32 %v248, %v443
    %v445 = vpop.f32.mrb[0].mxu0
    %446 = vmatprep.mubr.f32.mxu0 0.0
    %447 = vmatmul.mubr.f32.gmra.mrb[0].mxu0 %v306
    %v448 = vpop.f32.mrb[0].mxu0
    %v449 = vadd.f32 %v253, %v448
    %v450 = vpop.f32.mrb[0].mxu0
    %451 = vmatprep.mubr.f32.mxu0 0.0
    %452 = vmatmul.mubr.f32.gmra.mrb[0].mxu0 %v309
    %v453 = vpop.f32.mrb[0].mxu0
    %v454 = vadd.f32 %v258, %v453
    %v455 = vpop.f32.mrb[0].mxu0
    %456 = vmatprep.mubr.f32.mxu0 0.0
    %457 = vmatmul.mubr.f32.gmra.mrb[0].mxu0 %v312
    %v458 = vpop.f32.mrb[0].mxu0
    %v459 = vadd.f32 %v263, %v458
    %v460 = vpop.f32.mrb[0].mxu0
    %461 = vdwg.mxu0
    %v462 = vld [vmem:[%s4] sm:$0x1]
    %v464 = vlaneseq
    %v465 = vshrl.u32 %v464, 7
    %v466 = vsub.s32 0, %v465
    %v467 = vrot.slane %v462, %v466
    %v469 = vadd.f32 %v384, %v467
    %v470 = vadd.f32 %v389, %v467
    %v471 = vadd.f32 %v394, %v467
    %v472 = vadd.f32 %v399, %v467
    %v473 = vadd.f32 %v404, %v467
    %v474 = vadd.f32 %v409, %v467
    %v475 = vadd.f32 %v414, %v467
    %v476 = vadd.f32 %v419, %v467
    %v477 = vadd.f32 %v424, %v467
    %v478 = vadd.f32 %v429, %v467
    %v479 = vadd.f32 %v434, %v467
    %v480 = vadd.f32 %v439, %v467
    %v481 = vadd.f32 %v444, %v467
    %v482 = vadd.f32 %v449, %v467
    %v483 = vadd.f32 %v454, %v467
    %v484 = vadd.f32 %v459, %v467
    %v485 = vmax.f32 %v469, 0.0
    %v486 = vmax.f32 %v470, 0.0
    %v487 = vmax.f32 %v471, 0.0
    %v488 = vmax.f32 %v472, 0.0
    %v489 = vmax.f32 %v473, 0.0
    %v490 = vmax.f32 %v474, 0.0
    %v491 = vmax.f32 %v475, 0.0
    %v492 = vmax.f32 %v476, 0.0
    %v493 = vmax.f32 %v477, 0.0
    %v494 = vmax.f32 %v478, 0.0
    %v495 = vmax.f32 %v479, 0.0
    %v496 = vmax.f32 %v480, 0.0
    %v497 = vmax.f32 %v481, 0.0
    %v498 = vmax.f32 %v482, 0.0
    %v499 = vmax.f32 %v483, 0.0
    %v500 = vmax.f32 %v484, 0.0
    %v501 = vld [vmem:[%s5] sm:$0xff]
    %v502 = vld [vmem:[%s5 + $0x8] sm:$0xff]
    %v503 = vld [vmem:[%s5 + $0x10] sm:$0xff]
    %v504 = vld [vmem:[%s5 + $0x18] sm:$0xff]
    %v505 = vld [vmem:[%s6] sm:$0x1]
    %v507 = vlaneseq
    %v508 = vshrl.u32 %v507, 7
    %v509 = vsub.s32 0, %v508
    %v510 = vrot.slane %v505, %v509
    %vm512 = vcmask 261120
    %v514 = vsel %vm512, %v485, 0
    %v517 = vsel %vm512, %v486, 0
    %v520 = vsel %vm512, %v487, 0
    %v523 = vsel %vm512, %v488, 0
    %v526 = vsel %vm512, %v489, 0
    %v529 = vsel %vm512, %v490, 0
    %v532 = vsel %vm512, %v491, 0
    %v535 = vsel %vm512, %v492, 0
    %v538 = vsel %vm512, %v493, 0
    %v541 = vsel %vm512, %v494, 0
    %v544 = vsel %vm512, %v495, 0
    %v547 = vsel %vm512, %v496, 0
    %v550 = vsel %vm512, %v497, 0
    %v553 = vsel %vm512, %v498, 0
    %v556 = vsel %vm512, %v499, 0
    %v559 = vsel %vm512, %v500, 0
    %561 = vmatprep.subr.mxu0 0.0
    %562 = vmatpush1.msra.mxu0 %v501
    %563 = vmatprep.subr.mxu0 0.0
    %564 = vmatpush1.msra.mxu0 %v502
    %565 = vmatprep.subr.mxu0 0.0
    %566 = vmatpush1.msra.mxu0 %v503
    %567 = vmatprep.subr.mxu0 0.0
    %568 = vmatpush1.msra.mxu0 %v504
    %569 = vmatprep.subr.mxu0 0.0
    %570 = vmatpush1.msra.mxu0 0.0
    %571 = vmatprep.subr.mxu0 0.0
    %572 = vmatpush1.msra.mxu0 0.0
    %573 = vmatprep.subr.mxu0 0.0
    %574 = vmatpush1.msra.mxu0 0.0
    %575 = vmatprep.subr.mxu0 0.0
    %576 = vmatpush1.msra.mxu0 0.0
    %577 = vmatprep.subr.mxu0 0.0
    %578 = vmatpush1.msra.mxu0 0.0
    %579 = vmatprep.subr.mxu0 0.0
    %580 = vmatpush1.msra.mxu0 0.0
    %581 = vmatprep.subr.mxu0 0.0
    %582 = vmatpush1.msra.mxu0 0.0
    %583 = vmatprep.subr.mxu0 0.0
    %584 = vmatpush1.msra.mxu0 0.0
    %585 = vmatprep.subr.mxu0 0.0
    %586 = vmatpush1.msra.mxu0 0.0
    %587 = vmatprep.subr.mxu0 0.0
    %588 = vmatpush1.msra.mxu0 0.0
    %589 = vmatprep.subr.mxu0 0.0
    %590 = vmatpush1.msra.mxu0 0.0
    %591 = vmatprep.subr.mxu0 0.0
    %592 = vmatpush1.msra.mxu0 0.0
    %593 = vmatprep.subr.mxu0 0.0
    %594 = vmatpush1.msra.mxu0 0.0
    %595 = vmatprep.subr.mxu0 0.0
    %596 = vmatpush1.msra.mxu0 0.0
    %597 = vmatprep.subr.mxu0 0.0
    %598 = vmatpush1.msra.mxu0 0.0
    %599 = vmatprep.subr.mxu0 0.0
    %600 = vmatpush1.msra.mxu0 0.0
    %601 = vmatprep.subr.mxu0 0.0
    %602 = vmatpush1.msra.mxu0 0.0
    %603 = vmatprep.subr.mxu0 0.0
    %604 = vmatpush1.msra.mxu0 0.0
    %605 = vmatprep.subr.mxu0 0.0
    %606 = vmatpush1.msra.mxu0 0.0
    %607 = vmatprep.subr.mxu0 0.0
    %608 = vmatpush1.msra.mxu0 0.0
    %609 = vmatprep.subr.mxu0 0.0
    %610 = vmatpush1.msra.mxu0 0.0
    %611 = vmatprep.subr.mxu0 0.0
    %612 = vmatpush1.msra.mxu0 0.0
    %613 = vmatprep.subr.mxu0 0.0
    %614 = vmatpush1.msra.mxu0 0.0
    %615 = vmatprep.subr.mxu0 0.0
    %616 = vmatpush1.msra.mxu0 0.0
    %617 = vmatprep.subr.mxu0 0.0
    %618 = vmatpush1.msra.mxu0 0.0
    %619 = vmatprep.subr.mxu0 0.0
    %620 = vmatpush1.msra.mxu0 0.0
    %621 = vmatprep.subr.mxu0 0.0
    %622 = vmatpush1.msra.mxu0 0.0
    %623 = vmatprep.subr.mxu0 0.0
    %624 = vmatpush1.msra.mxu0 0.0
    %625 = vmatprep.mubr.f32.mxu0 0.0
    %626 = vmatmul.mubr.f32.gmra.mrb[0].mxu0 %v514
    %v627 = vpop.f32.mrb[0].mxu0
    %v628 = vadd.f32 %v510, %v627
    %v629 = vpop.f32.mrb[0].mxu0
    %630 = vmatprep.mubr.f32.mxu0 0.0
    %631 = vmatmul.mubr.f32.gmra.mrb[0].mxu0 %v517
    %v632 = vpop.f32.mrb[0].mxu0
    %v633 = vadd.f32 %v510, %v632
    %v634 = vpop.f32.mrb[0].mxu0
    %635 = vmatprep.mubr.f32.mxu0 0.0
    %636 = vmatmul.mubr.f32.gmra.mrb[0].mxu0 %v520
    %v637 = vpop.f32.mrb[0].mxu0
    %v638 = vadd.f32 %v510, %v637
    %v639 = vpop.f32.mrb[0].mxu0
    %640 = vmatprep.mubr.f32.mxu0 0.0
    %641 = vmatmul.mubr.f32.gmra.mrb[0].mxu0 %v523
    %v642 = vpop.f32.mrb[0].mxu0
    %v643 = vadd.f32 %v510, %v642
    %v644 = vpop.f32.mrb[0].mxu0
    %645 = vmatprep.mubr.f32.mxu0 0.0
    %646 = vmatmul.mubr.f32.gmra.mrb[0].mxu0 %v526
    %v647 = vpop.f32.mrb[0].mxu0
    %v648 = vadd.f32 %v510, %v647
    %v649 = vpop.f32.mrb[0].mxu0
    %650 = vmatprep.mubr.f32.mxu0 0.0
    %651 = vmatmul.mubr.f32.gmra.mrb[0].mxu0 %v529
    %v652 = vpop.f32.mrb[0].mxu0
    %v653 = vadd.f32 %v510, %v652
    %v654 = vpop.f32.mrb[0].mxu0
    %655 = vmatprep.mubr.f32.mxu0 0.0
    %656 = vmatmul.mubr.f32.gmra.mrb[0].mxu0 %v532
    %v657 = vpop.f32.mrb[0].mxu0
    %v658 = vadd.f32 %v510, %v657
    %v659 = vpop.f32.mrb[0].mxu0
    %660 = vmatprep.mubr.f32.mxu0 0.0
    %661 = vmatmul.mubr.f32.gmra.mrb[0].mxu0 %v535
    %v662 = vpop.f32.mrb[0].mxu0
    %v663 = vadd.f32 %v510, %v662
    %v664 = vpop.f32.mrb[0].mxu0
    %665 = vmatprep.mubr.f32.mxu0 0.0
    %666 = vmatmul.mubr.f32.gmra.mrb[0].mxu0 %v538
    %v667 = vpop.f32.mrb[0].mxu0
    %v668 = vadd.f32 %v510, %v667
    %v669 = vpop.f32.mrb[0].mxu0
    %670 = vmatprep.mubr.f32.mxu0 0.0
    %671 = vmatmul.mubr.f32.gmra.mrb[0].mxu0 %v541
    %v672 = vpop.f32.mrb[0].mxu0
    %v673 = vadd.f32 %v510, %v672
    %v674 = vpop.f32.mrb[0].mxu0
    %675 = vmatprep.mubr.f32.mxu0 0.0
    %676 = vmatmul.mubr.f32.gmra.mrb[0].mxu0 %v544
    %v677 = vpop.f32.mrb[0].mxu0
    %v678 = vadd.f32 %v510, %v677
    %v679 = vpop.f32.mrb[0].mxu0
    %680 = vmatprep.mubr.f32.mxu0 0.0
    %681 = vmatmul.mubr.f32.gmra.mrb[0].mxu0 %v547
    %v682 = vpop.f32.mrb[0].mxu0
    %v683 = vadd.f32 %v510, %v682
    %v684 = vpop.f32.mrb[0].mxu0
    %685 = vmatprep.mubr.f32.mxu0 0.0
    %686 = vmatmul.mubr.f32.gmra.mrb[0].mxu0 %v550
    %v687 = vpop.f32.mrb[0].mxu0
    %v688 = vadd.f32 %v510, %v687
    %v689 = vpop.f32.mrb[0].mxu0
    %690 = vmatprep.mubr.f32.mxu0 0.0
    %691 = vmatmul.mubr.f32.gmra.mrb[0].mxu0 %v553
    %v692 = vpop.f32.mrb[0].mxu0
    %v693 = vadd.f32 %v510, %v692
    %v694 = vpop.f32.mrb[0].mxu0
    %695 = vmatprep.mubr.f32.mxu0 0.0
    %696 = vmatmul.mubr.f32.gmra.mrb[0].mxu0 %v556
    %v697 = vpop.f32.mrb[0].mxu0
    %v698 = vadd.f32 %v510, %v697
    %v699 = vpop.f32.mrb[0].mxu0
    %700 = vmatprep.mubr.f32.mxu0 0.0
    %701 = vmatmul.mubr.f32.gmra.mrb[0].mxu0 %v559
    %v702 = vpop.f32.mrb[0].mxu0
    %v703 = vadd.f32 %v510, %v702
    %v704 = vpop.f32.mrb[0].mxu0
    %705 = vdwg.mxu0
    %v706 = vmax.f32 %v628, 0.0
    %v707 = vmax.f32 %v633, 0.0
    %v708 = vmax.f32 %v638, 0.0
    %v709 = vmax.f32 %v643, 0.0
    %v710 = vmax.f32 %v648, 0.0
    %v711 = vmax.f32 %v653, 0.0
    %v712 = vmax.f32 %v658, 0.0
    %v713 = vmax.f32 %v663, 0.0
    %v714 = vmax.f32 %v668, 0.0
    %v715 = vmax.f32 %v673, 0.0
    %v716 = vmax.f32 %v678, 0.0
    %v717 = vmax.f32 %v683, 0.0
    %v718 = vmax.f32 %v688, 0.0
    %v719 = vmax.f32 %v693, 0.0
    %v720 = vmax.f32 %v698, 0.0
    %v721 = vmax.f32 %v703, 0.0
    %v722 = vld [vmem:[%s7] sm:$0x1]
    %v724 = vlaneseq
    %v725 = vshrl.u32 %v724, 7
    %v726 = vsub.s32 0, %v725
    %v727 = vrot.slane %v722, %v726
    %v729 = vmul.f32 %v706, %v727
    %v730 = vmul.f32 %v707, %v727
    %v731 = vmul.f32 %v708, %v727
    %v732 = vmul.f32 %v709, %v727
    %v733 = vmul.f32 %v710, %v727
    %v734 = vmul.f32 %v711, %v727
    %v735 = vmul.f32 %v712, %v727
    %v736 = vmul.f32 %v713, %v727
    %v737 = vmul.f32 %v714, %v727
    %v738 = vmul.f32 %v715, %v727
    %v739 = vmul.f32 %v716, %v727
    %v740 = vmul.f32 %v717, %v727
    %v741 = vmul.f32 %v718, %v727
    %v742 = vmul.f32 %v719, %v727
    %v743 = vmul.f32 %v720, %v727
    %v744 = vmul.f32 %v721, %v727
    %v745 = vsel %vm512, %v729, 0.0
    %746 = vadd.xlane.f32.xlu0 %v745
    %v747 = vpop.xlane.xlu0 %746
    %v748 = vsel %vm512, %v730, 0.0
    %749 = vadd.xlane.f32.xlu0 %v748
    %v750 = vpop.xlane.xlu0 %749
    %v751 = vsel %vm512, %v731, 0.0
    %752 = vadd.xlane.f32.xlu0 %v751
    %v753 = vpop.xlane.xlu0 %752
    %v754 = vsel %vm512, %v732, 0.0
    %755 = vadd.xlane.f32.xlu0 %v754
    %v756 = vpop.xlane.xlu0 %755
    %v757 = vsel %vm512, %v733, 0.0
    %758 = vadd.xlane.f32.xlu0 %v757
    %v759 = vpop.xlane.xlu0 %758
    %v760 = vsel %vm512, %v734, 0.0
    %761 = vadd.xlane.f32.xlu0 %v760
    %v762 = vpop.xlane.xlu0 %761
    %v763 = vsel %vm512, %v735, 0.0
    %764 = vadd.xlane.f32.xlu0 %v763
    %v765 = vpop.xlane.xlu0 %764
    %v766 = vsel %vm512, %v736, 0.0
    %767 = vadd.xlane.f32.xlu0 %v766
    %v768 = vpop.xlane.xlu0 %767
    %v769 = vsel %vm512, %v737, 0.0
    %770 = vadd.xlane.f32.xlu0 %v769
    %v771 = vpop.xlane.xlu0 %770
    %v772 = vsel %vm512, %v738, 0.0
    %773 = vadd.xlane.f32.xlu0 %v772
    %v774 = vpop.xlane.xlu0 %773
    %v775 = vsel %vm512, %v739, 0.0
    %776 = vadd.xlane.f32.xlu0 %v775
    %v777 = vpop.xlane.xlu0 %776
    %v778 = vsel %vm512, %v740, 0.0
    %779 = vadd.xlane.f32.xlu0 %v778
    %v780 = vpop.xlane.xlu0 %779
    %v781 = vsel %vm512, %v741, 0.0
    %782 = vadd.xlane.f32.xlu0 %v781
    %v783 = vpop.xlane.xlu0 %782
    %v784 = vsel %vm512, %v742, 0.0
    %785 = vadd.xlane.f32.xlu0 %v784
    %v786 = vpop.xlane.xlu0 %785
    %v787 = vsel %vm512, %v743, 0.0
    %788 = vadd.xlane.f32.xlu0 %v787
    %v789 = vpop.xlane.xlu0 %788
    %v790 = vsel %vm512, %v744, 0.0
    %791 = vadd.xlane.f32.xlu0 %v790
    %v792 = vpop.xlane.xlu0 %791
    %s793 = sld [smem:[#allocation2]]
    %v794 = vstv %s793
    %v795 = vadd.f32 %v747, %v794
    %v796 = vadd.f32 %v750, %v794
    %v797 = vadd.f32 %v753, %v794
    %v798 = vadd.f32 %v756, %v794
    %v799 = vadd.f32 %v759, %v794
    %v800 = vadd.f32 %v762, %v794
    %v801 = vadd.f32 %v765, %v794
    %v802 = vadd.f32 %v768, %v794
    %v803 = vadd.f32 %v771, %v794
    %v804 = vadd.f32 %v774, %v794
    %v805 = vadd.f32 %v777, %v794
    %v806 = vadd.f32 %v780, %v794
    %v807 = vadd.f32 %v783, %v794
    %v808 = vadd.f32 %v786, %v794
    %v809 = vadd.f32 %v789, %v794
    %v810 = vadd.f32 %v792, %v794
    %v811 = vand.u32 2147483647, %v795
    %v812 = vand.u32 2147483647, %v796
    %v813 = vand.u32 2147483647, %v797
    %v814 = vand.u32 2147483647, %v798
    %v815 = vand.u32 2147483647, %v799
    %v816 = vand.u32 2147483647, %v800
    %v817 = vand.u32 2147483647, %v801
    %v818 = vand.u32 2147483647, %v802
    %v819 = vand.u32 2147483647, %v803
    %v820 = vand.u32 2147483647, %v804
    %v821 = vand.u32 2147483647, %v805
    %v822 = vand.u32 2147483647, %v806
    %v823 = vand.u32 2147483647, %v807
    %v824 = vand.u32 2147483647, %v808
    %v825 = vand.u32 2147483647, %v809
    %v826 = vand.u32 2147483647, %v810
    %v827 = vsub.f32 0.0, %v811
    %v828 = vsub.f32 0.0, %v812
    %v829 = vsub.f32 0.0, %v813
    %v830 = vsub.f32 0.0, %v814
    %v831 = vsub.f32 0.0, %v815
    %v832 = vsub.f32 0.0, %v816
    %v833 = vsub.f32 0.0, %v817
    %v834 = vsub.f32 0.0, %v818
    %v835 = vsub.f32 0.0, %v819
    %v836 = vsub.f32 0.0, %v820
    %v837 = vsub.f32 0.0, %v821
    %v838 = vsub.f32 0.0, %v822
    %v839 = vsub.f32 0.0, %v823
    %v840 = vsub.f32 0.0, %v824
    %v841 = vsub.f32 0.0, %v825
    %v842 = vsub.f32 0.0, %v826
    %v859 = vlaneseq
    %v860 = vand.u32 %v859, 127
    %v861 = vlaneseq
    %v862 = vshrl.u32 %v861, 7
    %v863 = vsub.s32 %v860, %v862
    %v864 = vrot.slane %v827, %v863
    %v865 = vadd.s32 %v860, 4294967288
    %v866 = vlaneseq
    %v867 = vshrl.u32 %v866, 7
    %v868 = vsub.s32 %v865, %v867
    %v869 = vrot.slane %v828, %v868
    %vm870 = vcmask 130112
    %v871 = vsel %vm870, %v869, %v864
    %v872 = vadd.s32 %v860, 4294967280
    %v873 = vlaneseq
    %v874 = vshrl.u32 %v873, 7
    %v875 = vsub.s32 %v872, %v874
    %v876 = vrot.slane %v829, %v875
    %vm877 = vcmask 195712
    %v878 = vsel %vm877, %v876, %v871
    %v879 = vadd.s32 %v860, 4294967272
    %v880 = vlaneseq
    %v881 = vshrl.u32 %v880, 7
    %v882 = vsub.s32 %v879, %v881
    %v883 = vrot.slane %v830, %v882
    %vm884 = vcmask 261312
    %v885 = vsel %vm884, %v883, %v878
    %v886 = vadd.s32 %v860, 4294967264
    %v887 = vlaneseq
    %v888 = vshrl.u32 %v887, 7
    %v889 = vsub.s32 %v886, %v888
    %v890 = vrot.slane %v831, %v889
    %vm891 = vcmask 326912
    %v892 = vsel %vm891, %v890, %v885
    %v893 = vadd.s32 %v860, 4294967256
    %v894 = vlaneseq
    %v895 = vshrl.u32 %v894, 7
    %v896 = vsub.s32 %v893, %v895
    %v897 = vrot.slane %v832, %v896
    %vm898 = vcmask 392512
    %v899 = vsel %vm898, %v897, %v892
    %v900 = vadd.s32 %v860, 4294967248
    %v901 = vlaneseq
    %v902 = vshrl.u32 %v901, 7
    %v903 = vsub.s32 %v900, %v902
    %v904 = vrot.slane %v833, %v903
    %vm905 = vcmask 458112
    %v906 = vsel %vm905, %v904, %v899
    %v907 = vadd.s32 %v860, 4294967240
    %v908 = vlaneseq
    %v909 = vshrl.u32 %v908, 7
    %v910 = vsub.s32 %v907, %v909
    %v911 = vrot.slane %v834, %v910
    %vm912 = vcmask 523712
    %v913 = vsel %vm912, %v911, %v906
    %v914 = vadd.s32 %v860, 4294967232
    %v915 = vlaneseq
    %v916 = vshrl.u32 %v915, 7
    %v917 = vsub.s32 %v914, %v916
    %v918 = vrot.slane %v835, %v917
    %vm919 = vcmask 589312
    %v920 = vsel %vm919, %v918, %v913
    %v921 = vadd.s32 %v860, 4294967224
    %v922 = vlaneseq
    %v923 = vshrl.u32 %v922, 7
    %v924 = vsub.s32 %v921, %v923
    %v925 = vrot.slane %v836, %v924
    %vm926 = vcmask 654912
    %v927 = vsel %vm926, %v925, %v920
    %v928 = vadd.s32 %v860, 4294967216
    %v929 = vlaneseq
    %v930 = vshrl.u32 %v929, 7
    %v931 = vsub.s32 %v928, %v930
    %v932 = vrot.slane %v837, %v931
    %vm933 = vcmask 720512
    %v934 = vsel %vm933, %v932, %v927
    %v935 = vadd.s32 %v860, 4294967208
    %v936 = vlaneseq
    %v937 = vshrl.u32 %v936, 7
    %v938 = vsub.s32 %v935, %v937
    %v939 = vrot.slane %v838, %v938
    %vm940 = vcmask 786112
    %v941 = vsel %vm940, %v939, %v934
    %v942 = vadd.s32 %v860, 4294967200
    %v943 = vlaneseq
    %v944 = vshrl.u32 %v943, 7
    %v945 = vsub.s32 %v942, %v944
    %v946 = vrot.slane %v839, %v945
    %vm947 = vcmask 851712
    %v948 = vsel %vm947, %v946, %v941
    %v949 = vadd.s32 %v860, 4294967192
    %v950 = vlaneseq
    %v951 = vshrl.u32 %v950, 7
    %v952 = vsub.s32 %v949, %v951
    %v953 = vrot.slane %v840, %v952
    %vm954 = vcmask 917312
    %v955 = vsel %vm954, %v953, %v948
    %v956 = vadd.s32 %v860, 4294967184
    %v957 = vlaneseq
    %v958 = vshrl.u32 %v957, 7
    %v959 = vsub.s32 %v956, %v958
    %v960 = vrot.slane %v841, %v959
    %vm961 = vcmask 982912
    %v962 = vsel %vm961, %v960, %v955
    %v963 = vadd.s32 %v860, 4294967176
    %v964 = vlaneseq
    %v965 = vshrl.u32 %v964, 7
    %v966 = vsub.s32 %v963, %v965
    %v967 = vrot.slane %v842, %v966
    %vm968 = vcmask 1048512
    %v969 = vsel %vm968, %v967, %v962
    %971 = vst [vmem:[#allocation3] sm:$0x1] %v969
    // Predicated region
    $region38: #{tpu_custom_call.1} parent=1 // pred_check
      _
    $region39: #{tpu_custom_call.1} parent=1 // pred_check_branch
      %973 = sbr.rel (0) target = $region41
    $region40: #{tpu_custom_call.1} parent=1 // pred_region
      %s975 = ssub.s32 16, 16
      %976 = vsyncadd [#allocation4], %s975
      %s978 = sshll.u32 [#allocation3], 4
      %s979 = int_to_ptr.vmem [resolvable:$true] %s978
      %981 = dma.vmem_to_hbm [thread:$0]  %s979, 16, %s9, [#allocation4]
    $region41: #{tpu_custom_call.1} parent=1 // pred_fallthru
      _
    // Predicated region
    $region42: #{tpu_custom_call.1} parent=1 // pred_check
      _
    $region43: #{tpu_custom_call.1} parent=1 // pred_check_branch
      %983 = sbr.rel (0) target = $region45
    $region44: #{tpu_custom_call.1} parent=1 // pred_region
      %984 = dma.done [#allocation4], 16
    $region45: #{tpu_custom_call.1} parent=1 // pred_fallthru
      _
    %985 = vsyncpa [#allocation4], 1

</llo_original>
